<compile_context>
chip_gen: v5e
topology: v5e:2x2
jax: 0.10.0
libtpu: 0.0.40
codegen_flags: <defaults>
</compile_context>

<pallas_src>
import functools

import numpy as np
import jax
import jax.numpy as jnp
from jax import lax
from jax.experimental import pallas as pl
from jax.experimental.pallas import tpu as pltpu


def _focal_loss_kernel(x_ref, t_ref, *rest, gamma, use_alpha, mask_tail,
                       tile, total_s):
    """One (spatial-tile, batch) grid step.

    x_ref: (C, ts) logits (input dtype)      t_ref: (1, ts) int32 targets
    at_ref (only if use_alpha): (1, ts) f32 per-pixel alpha[target]
    o_ref: (1, ts) f32 per-pixel loss
    """
    if use_alpha:
        at_ref, o_ref = rest
    else:
        (o_ref,) = rest

    x = x_ref[...].astype(jnp.float32)                        # (C, ts)
    t = t_ref[...]                                            # (1, ts)

    # Numerically stable log-softmax over the class (sublane) axis.
    m = jnp.max(x, axis=0, keepdims=True)                     # (1, ts)
    z = x - m                                                 # (C, ts)
    e = jnp.exp(z)                                            # (C, ts)  EUP
    se = jnp.sum(e, axis=0, keepdims=True)                    # (1, ts)

    # One-hot gather of the target class along sublanes; the (C,1) iota
    # broadcasts in the compare instead of materializing a (C, ts) int tile.
    cls = lax.broadcasted_iota(jnp.int32, (x.shape[0], 1), 0)  # (C, 1)
    onehot = cls == t                                          # (C, ts)
    z_t = jnp.sum(jnp.where(onehot, z, 0.0), axis=0, keepdims=True)  # (1, ts)

    logpt = z_t - jnp.log(se)                                  # log_softmax[target]
    pt = jnp.exp(logpt)                                        # EUP; pre-alpha logpt

    if use_alpha:
        logpt = logpt * at_ref[...]                            # alpha applied to logpt (as in the module)

    omp = jnp.maximum(1.0 - pt, 0.0)                           # clamp rounding noise
    g = float(gamma)
    if g == 0.0:
        focal = jnp.ones_like(pt)
    elif g == int(g) and 0 < int(g) <= 16:
        focal = lax.integer_pow(omp, int(g))                   # plain multiplies
    else:
        focal = omp ** g

    loss = -(focal * logpt)

    if mask_tail:
        # Last block may hang past S: zero the out-of-range lanes (cheap, the
        # mask lives on a (1, ts) shape -> ~1/C-th of the main tile's work).
        j = pl.program_id(0)
        col = j * tile + lax.broadcasted_iota(jnp.int32, loss.shape, 1)
        loss = jnp.where(col < total_s, loss, 0.0)

    o_ref[...] = loss


def _vmem_capacity_bytes():
    try:
        info = pltpu.get_tpu_info()
        cap = getattr(info, "vmem_capacity_bytes", None)
        if cap:
            return int(cap)
    except Exception:
        pass
    return 64 << 20  # conservative default (v7x per-TC physical)


def _pick_spatial_tile(C, S, itemsize, use_alpha):
    """Lane-tile size + scoped-VMEM limit, sized per TPU generation.

    Targets a few MiB of logits per grid step so the ~0.35us per-step pipeline
    overhead is <10%, while keeping the double-buffered tiles plus the
    Mosaic-materialized f32 temps (z, e, selects) under a working-set budget
    that fits even v7x's 64 MiB physical VMEM with headroom.
    """
    cap = _vmem_capacity_bytes()
    if cap >= (100 << 20):
        # v5e / v6e: 128 MiB physical VMEM, but scoped defaults of 16/32 MiB.
        target_block_bytes = 4 << 20
        vmem_limit = min(96 << 20, cap - (16 << 20))
    else:
        # v7x (64 MiB per TC) or unknown: faster HBM -> bigger blocks, but
        # keep the scoped limit well below physical.
        target_block_bytes = 6 << 20
        vmem_limit = 48 << 20

    ws_budget = 32 << 20                                   # safe on every generation
    io_per_col = 2 * (C * itemsize + 8 + (4 if use_alpha else 0))  # 2x buffered in/out
    tmp_per_col = 16 * C + 16                              # ~4 live f32 (C,ts) temps + (1,ts) temps

    ts = min(target_block_bytes // max(1, C * itemsize),
             ws_budget // (io_per_col + tmp_per_col),
             128 * 1024)
    ts = max(128, (ts // 128) * 128)                       # lane multiple of 128
    ts = int(S) if S <= ts else int(ts)                    # full-dim block if S is small
    return ts, int(vmem_limit)


def focal_loss(logits, target, *, gamma=0.0, alpha=None, size_average=True,
               spatial_tile=None):
    """Matches FocalLoss.forward from lib/focalloss.py (forward pass only).

    logits: [B, C, H, W] (or [N, C]);  target: [B, H, W] (or [N]) int class ids.
    alpha:  None, float (binary -> [a, 1-a]), or per-class list of length C.
    """
    if logits.ndim > 2:
        B, C = logits.shape[0], logits.shape[1]
        x = logits.reshape(B, C, -1)                 # [B, C, S]: free reshape, no transpose
        t = target.reshape(B, 1, -1).astype(jnp.int32)
    else:
        # 2-D [N, C] path: one XLA transpose (~3x this tensor's HBM bytes)
        # puts classes on sublanes so the same lane-dense kernel applies.
        B, C = 1, logits.shape[1]
        x = logits.T[None]                           # [1, C, N]
        t = target.reshape(1, 1, -1).astype(jnp.int32)

    S = x.shape[2]
    n = B * S

    # alpha -> flat per-class vector (mirrors the module's float / list handling).
    if alpha is None:
        alpha_vec = None
        use_alpha = False
    elif isinstance(alpha, (float, int)):
        assert C == 2, "scalar alpha implies a 2-class problem (C == 2)"
        alpha_vec = jnp.array([float(alpha), 1.0 - float(alpha)], jnp.float32)
        use_alpha = True
    else:
        alpha_np = np.asarray(alpha, np.float32).reshape(-1)
        assert alpha_np.shape[0] == C, "len(alpha) must equal the class count"
        alpha_vec = jnp.asarray(alpha_np)
        use_alpha = True

    ts, vmem_limit = _pick_spatial_tile(C, S, x.dtype.itemsize, use_alpha)
    if spatial_tile is not None:
        ts = min(int(spatial_tile), int(S))
    mask_tail = (S % ts) != 0

    # Spatial axis leads so the big parallel axis is what gets split across
    # the two TensorCores on v7x even when B is 1 or odd.
    grid = (pl.cdiv(S, ts), B)

    kernel = functools.partial(_focal_loss_kernel, gamma=float(gamma),
                               use_alpha=use_alpha, mask_tail=mask_tail,
                               tile=ts, total_s=int(S))

    in_specs = [
        pl.BlockSpec((None, C, ts), lambda j, b: (b, 0, j)),   # logits tile
        pl.BlockSpec((None, 1, ts), lambda j, b: (b, 0, j)),   # targets tile
    ]
    args = [x, t]
    if use_alpha:
        # Per-pixel alpha gathered once in the wrapper (tiny XLA gather on the
        # int targets); streamed as a lane-dense f32 tile instead of a
        # broadcast+select+sublane-sum inside the kernel.
        at = alpha_vec[t]                                      # (B, 1, S) f32
        in_specs.append(pl.BlockSpec((None, 1, ts), lambda j, b: (b, 0, j)))
        args.append(at)

    per_pixel = pl.pallas_call(
        kernel,
        out_shape=jax.ShapeDtypeStruct((B, 1, S), jnp.float32),
        grid=grid,
        in_specs=in_specs,
        out_specs=pl.BlockSpec((None, 1, ts), lambda j, b: (b, 0, j)),
        compiler_params=pltpu.CompilerParams(
            dimension_semantics=("parallel", "parallel"),
            vmem_limit_bytes=vmem_limit),
    )(*args)

    total = jnp.sum(per_pixel)
    return total / n if size_average else total


def _focal_loss_ref(logits, target, *, gamma, alpha, size_average):
    """Pure-JAX reference mirroring the PyTorch module."""
    if logits.ndim > 2:
        B, C = logits.shape[0], logits.shape[1]
        x = jnp.transpose(logits.reshape(B, C, -1), (0, 2, 1)).reshape(-1, C)
    else:
        C = logits.shape[1]
        x = logits
    t = target.reshape(-1).astype(jnp.int32)
    logp = jax.nn.log_softmax(x, axis=-1)
    logpt = jnp.take_along_axis(logp, t[:, None], axis=1)[:, 0]
    pt = jnp.exp(logpt)
    if alpha is not None:
        if isinstance(alpha, (float, int)):
            a = jnp.array([float(alpha), 1.0 - float(alpha)], jnp.float32)
        else:
            a = jnp.asarray(np.asarray(alpha, np.float32))
        logpt = logpt * a[t]
    loss = -((1.0 - pt) ** gamma) * logpt
    return jnp.mean(loss) if size_average else jnp.sum(loss)


if __name__ == "__main__":
    key = jax.random.PRNGKey(0)
    k1, k2, k3, k4, k5, k6 = jax.random.split(key, 6)

    # Case 1: NCHW, gamma=2, per-class alpha, mean reduction.
    B, C, H, W = 2, 4, 16, 16
    logits = jax.random.normal(k1, (B, C, H, W), jnp.float32)
    target = jax.random.randint(k2, (B, H, W), 0, C, jnp.int32)
    gamma = 2.0
    alpha = [0.75, 0.25, 0.5, 1.0]
    out = jax.block_until_ready(
        focal_loss(logits, target, gamma=gamma, alpha=alpha, size_average=True))
    ref = _focal_loss_ref(logits, target, gamma=gamma, alpha=alpha,
                          size_average=True)
    assert jnp.allclose(out, ref, atol=1e-5, rtol=1e-5), (out, ref)

    # Case 2: gamma=0, no alpha, sum reduction (exercises the other branches).
    out2 = jax.block_until_ready(
        focal_loss(logits, target, gamma=0.0, alpha=None, size_average=False))
    ref2 = _focal_loss_ref(logits, target, gamma=0.0, alpha=None,
                           size_average=False)
    assert jnp.allclose(out2, ref2, atol=1e-4, rtol=1e-5), (out2, ref2)

    # Case 3: ragged spatial tail (S=272, tile=128), B=1, odd C, no alpha.
    B3, C3, H3, W3 = 1, 3, 17, 16
    logits3 = jax.random.normal(k3, (B3, C3, H3, W3), jnp.float32)
    target3 = jax.random.randint(k4, (B3, H3, W3), 0, C3, jnp.int32)
    out3 = jax.block_until_ready(
        focal_loss(logits3, target3, gamma=2.0, alpha=None, size_average=True,
                   spatial_tile=128))
    ref3 = _focal_loss_ref(logits3, target3, gamma=2.0, alpha=None,
                           size_average=True)
    assert jnp.allclose(out3, ref3, atol=1e-5, rtol=1e-5), (out3, ref3)

    # Case 4: 2-D [N, C] classification path, integer gamma, per-class alpha.
    N4, C4 = 64, 8
    logits4 = jax.random.normal(k5, (N4, C4), jnp.float32)
    target4 = jax.random.randint(k6, (N4,), 0, C4, jnp.int32)
    alpha4 = [0.5 + 0.05 * i for i in range(C4)]
    out4 = jax.block_until_ready(
        focal_loss(logits4, target4, gamma=1.0, alpha=alpha4, size_average=True))
    ref4 = _focal_loss_ref(logits4, target4, gamma=1.0, alpha=alpha4,
                           size_average=True)
    assert jnp.allclose(out4, ref4, atol=1e-5, rtol=1e-5), (out4, ref4)

    print("KERNEL_OK")
</pallas_src>

<mosaic_0001>
module attributes {stable_mosaic.version = 11 : i64} {
  func.func @_focal_loss_kernel(%arg0: i32, %arg1: i32, %arg2: memref<1x4x256xf32, #tpu.memory_space<vmem>>, %arg3: memref<1x1x256xi32, #tpu.memory_space<vmem>>, %arg4: memref<1x1x256xf32, #tpu.memory_space<vmem>>, %arg5: memref<1x1x256xf32, #tpu.memory_space<vmem>>) attributes {dimension_semantics = [#tpu.dimension_semantics<parallel>, #tpu.dimension_semantics<parallel>], iteration_bounds = array<i64: 1, 2>, scalar_prefetch = 0 : i64, scratch_operands = 0 : i64, tpu.core_type = #tpu.core_type<tc>, window_params = [{transform_indices = @transform_0, window_bounds = array<i64: 1, 4, 256>}, {transform_indices = @transform_1, window_bounds = array<i64: 1, 1, 256>}, {transform_indices = @transform_2, window_bounds = array<i64: 1, 1, 256>}, {transform_indices = @transform_3, window_bounds = array<i64: 1, 1, 256>}]} {
    %c0 = arith.constant 0 : index
    %c0_0 = arith.constant 0 : index
    %c0_1 = arith.constant 0 : index
    %0 = vector.load %arg2[%c0, %c0_0, %c0_1] : memref<1x4x256xf32, #tpu.memory_space<vmem>>, vector<1x4x256xf32>
    %1 = vector.shape_cast %0 : vector<1x4x256xf32> to vector<4x256xf32>
    %c0_2 = arith.constant 0 : index
    %c0_3 = arith.constant 0 : index
    %c0_4 = arith.constant 0 : index
    %2 = vector.load %arg3[%c0_2, %c0_3, %c0_4] : memref<1x1x256xi32, #tpu.memory_space<vmem>>, vector<1x1x256xi32>
    %3 = vector.shape_cast %2 : vector<1x1x256xi32> to vector<1x256xi32>
    %cst = arith.constant dense<0xFF800000> : vector<256xf32>
    %4 = vector.multi_reduction <maximumf>, %1, %cst [0] : vector<4x256xf32> to vector<256xf32>
    %5 = vector.shape_cast %4 : vector<256xf32> to vector<1x256xf32>
    %6 = vector.broadcast %5 : vector<1x256xf32> to vector<4x256xf32>
    %7 = arith.subf %1, %6 : vector<4x256xf32>
    %8 = math.exp %7 : vector<4x256xf32>
    %cst_5 = arith.constant dense<0.000000e+00> : vector<256xf32>
    %9 = vector.multi_reduction <add>, %8, %cst_5 [0] : vector<4x256xf32> to vector<256xf32>
    %10 = vector.shape_cast %9 : vector<256xf32> to vector<1x256xf32>
    %11 = tpu.iota {dimensions = array<i32: 0>} : vector<4x1xi32>
    %12 = vector.broadcast %11 : vector<4x1xi32> to vector<4x256xi32>
    %13 = vector.broadcast %3 : vector<1x256xi32> to vector<4x256xi32>
    %14 = arith.cmpi eq, %12, %13 : vector<4x256xi32>
    %cst_6 = arith.constant 0.000000e+00 : f32
    %15 = vector.broadcast %cst_6 : f32 to vector<4x256xf32>
    %16 = arith.select %14, %7, %15 : vector<4x256xi1>, vector<4x256xf32>
    %cst_7 = arith.constant dense<0.000000e+00> : vector<256xf32>
    %17 = vector.multi_reduction <add>, %16, %cst_7 [0] : vector<4x256xf32> to vector<256xf32>
    %18 = vector.shape_cast %17 : vector<256xf32> to vector<1x256xf32>
    %19 = math.log %10 : vector<1x256xf32>
    %20 = arith.subf %18, %19 : vector<1x256xf32>
    %21 = math.exp %20 : vector<1x256xf32>
    %c0_8 = arith.constant 0 : index
    %c0_9 = arith.constant 0 : index
    %c0_10 = arith.constant 0 : index
    %22 = vector.load %arg4[%c0_8, %c0_9, %c0_10] : memref<1x1x256xf32, #tpu.memory_space<vmem>>, vector<1x1x256xf32>
    %23 = vector.shape_cast %22 : vector<1x1x256xf32> to vector<1x256xf32>
    %24 = arith.mulf %20, %23 : vector<1x256xf32>
    %cst_11 = arith.constant 1.000000e+00 : f32
    %25 = vector.broadcast %cst_11 : f32 to vector<1x256xf32>
    %26 = arith.subf %25, %21 : vector<1x256xf32>
    %cst_12 = arith.constant 0.000000e+00 : f32
    %27 = vector.broadcast %cst_12 : f32 to vector<1x256xf32>
    %28 = arith.maximumf %26, %27 : vector<1x256xf32>
    %29 = arith.mulf %28, %28 : vector<1x256xf32>
    %30 = arith.mulf %29, %24 : vector<1x256xf32>
    %cst_13 = arith.constant 0.000000e+00 : f32
    %31 = vector.broadcast %cst_13 : f32 to vector<1x256xf32>
    %32 = arith.subf %31, %30 : vector<1x256xf32>
    %c0_14 = arith.constant 0 : index
    %c0_15 = arith.constant 0 : index
    %c0_16 = arith.constant 0 : index
    %33 = vector.load %arg5[%c0_14, %c0_15, %c0_16] : memref<1x1x256xf32, #tpu.memory_space<vmem>>, vector<1x1x256xf32>
    %34 = vector.shape_cast %33 : vector<1x1x256xf32> to vector<1x256xf32>
    %35 = vector.shape_cast %32 : vector<1x256xf32> to vector<1x1x256xf32>
    tpu.vector_store %arg5[%c0_14, %c0_15, %c0_16], %35 {strides = array<i32>} : memref<1x1x256xf32, #tpu.memory_space<vmem>>, vector<1x1x256xf32>,
    return
  }
  func.func @transform_0(%arg0: i32, %arg1: i32) -> (i32, i32, i32) {
    %c0_i32 = arith.constant 0 : i32
    %c0_i32_0 = arith.constant 0 : i32
    return %arg1, %c0_i32, %arg0 : i32, i32, i32
  }
  func.func @transform_1(%arg0: i32, %arg1: i32) -> (i32, i32, i32) {
    %c0_i32 = arith.constant 0 : i32
    %c0_i32_0 = arith.constant 0 : i32
    return %arg1, %c0_i32, %arg0 : i32, i32, i32
  }
  func.func @transform_2(%arg0: i32, %arg1: i32) -> (i32, i32, i32) {
    %c0_i32 = arith.constant 0 : i32
    %c0_i32_0 = arith.constant 0 : i32
    return %arg1, %c0_i32, %arg0 : i32, i32, i32
  }
  func.func @transform_3(%arg0: i32, %arg1: i32) -> (i32, i32, i32) {
    %c0_i32 = arith.constant 0 : i32
    %c0_i32_0 = arith.constant 0 : i32
    return %arg1, %c0_i32, %arg0 : i32, i32, i32
  }
}

</mosaic_0001>

<llo_original>
// kernel: tpu_custom_call.1
$region0: #{tpu_custom_call.1}
  #allocation0 [shape = 'u32[]', space=smem, size = 0x4, offset = 0x4, fixed_abs, tag = 'smem constant byte address 0x4 - core index']
  #allocation1 [shape = 'u32[72,128]{1,0:T(1,128)}', space=vmem, size = 0x9000, scoped, tag = 'internal scratch']
  %s0 = inlined_call_operand.hbm [shape: f32[2,4,256], index: 0, kind: input, shape index: {}]
  %s1 = inlined_call_operand.hbm [shape: s32[2,1,256], index: 1, kind: input, shape index: {}]
  %s2 = inlined_call_operand.hbm [shape: f32[2,1,256], index: 2, kind: input, shape index: {}]
  %s3 = inlined_call_operand.hbm [shape: f32[2,1,256], index: 3, kind: output, shape index: {}]
  %s4 = sld [smem:[#allocation0]]
  $region57: #{tpu_custom_call.1} parent=0
    _
  %s6 = ssub.s32 1, %s4
  %s7 = scalar_select 0, %s6, %s4
  $region1: #{tpu_custom_call.1} parent=0
    #allocation2 [shape = 'u8[8192]{0}', space=vmem, size = 0x2000, scoped, tag = 'input window, operand 0']
    #allocation3 [shape = 's32[2]{0}', space=sflag, size = 0x8, scoped, tag = 'scoped memory for tpu_custom_call.1']
    #allocation4 [shape = 's32[2]{0}', space=sflag, size = 0x8, scoped, tag = 'scoped memory for tpu_custom_call.1']
    #allocation5 [shape = 'u8[2048]{0}', space=vmem, size = 0x800, scoped, tag = 'input window, operand 1']
    #allocation6 [shape = 's32[2]{0}', space=sflag, size = 0x8, scoped, tag = 'scoped memory for tpu_custom_call.1']
    #allocation7 [shape = 'u8[2048]{0}', space=vmem, size = 0x800, scoped, tag = 'input window, operand 2']
    #allocation8 [shape = 'u8[2048]{0}', space=vmem, size = 0x800, scoped, tag = 'output window, operand 0']
    %8 = vsyncpa [#allocation3], 0
    %s9 = scalar_lea.sflag [#allocation3], 1
    %10 = vsyncpa %s9, 0
    %11 = vsyncpa [#allocation6], 0
    %s12 = scalar_lea.sflag [#allocation6], 1
    %13 = vsyncpa %s12, 0
    %14 = vsyncpa [#allocation4], 0
    %s15 = scalar_lea.sflag [#allocation4], 1
    %16 = vsyncpa %s15, 0
    loop: start=0, step=1, limit=4
    $region2: #{tpu_custom_call.1} parent=1 // loop_pre_header
      _
    $region3: #{tpu_custom_call.1} parent=1 // loop_header
      %s18 = sphi 0, %s22
      %p19 = scmp.ge.s32.totalorder %s18, 4
      %s25 = sphi 0, %s37
      %s26 = sphi 0, %s33
      %s27 = sphi 0, %s25
      %s28 = sphi 0, %s26
      %s29 = sphi 0, %s27
      %s30 = sphi 0, %s28
      %s42 = sphi 0, %s44
      %s45 = sphi 0, %s42
      %s46 = sphi 0, %s45
      %s62 = sphi 0, %s46
      %s70 = sphi 0, %s72
      %s73 = sphi 0, %s70
      %s74 = sphi 0, %s73
      %s90 = sphi 0, %s74
      %s98 = sphi 0, %s100
      %s101 = sphi 0, %s98
      %s102 = sphi 0, %s101
      %s118 = sphi 0, %s102
      %s126 = sphi 0, %s128
      %s129 = sphi 0, %s126
      %s130 = sphi 0, %s129
      %s146 = sphi 0, %s130
    $region4: #{tpu_custom_call.1} parent=1 // loop_header_branch
      %21 = sbr.rel (%p19) target = $region8
    $region5: #{tpu_custom_call.1} parent=1 // loop_body
      %s23 = ssub.s32 %s18, 1
      %s24 = ssub.s32 %s18, 2
      %s31 = sadd.s32 1, %s26
      %p32 = scmp.ge.s32.totalorder %s31, 2
      %s33 = scalar_select %p32, 0, %s31
      %s34 = sadd.s32 1, %s25
      %s35 = scalar_select %p32, %s34, %s25
      %p36 = scmp.ge.s32.totalorder %s35, 1
      %s37 = scalar_select %p36, 0, %s35
      %s38 = ssub.s32 %s26, %s33
      %s39 = ssub.s32 %s25, %s37
      %s40 = sor.u32 %s38, %s39
      %p41 = scmp.eq.s32.totalorder %s40, 0
      %s43 = sadd.s32 %s42, 1
      %s44 = scalar_select %p41, %s42, %s43
      %p47 = pneg %p41
      %p48 = scmp.eq.s32.totalorder %s18, 1
      %p49 = por %p47, %p48
      %p50 = scmp.ne.s32.totalorder %s42, %s45
      %p51 = scmp.eq.s32.totalorder %s18, 0
      %p52 = por %p50, %p51
      %p53 = scmp.ne.s32.totalorder %s42, %s45
      %p54 = scmp.eq.s32.totalorder %s23, 1
      %p55 = por %p53, %p54
      %p56 = scmp.ne.s32.totalorder %s45, %s46
      %p57 = scmp.eq.s32.totalorder %s23, 0
      %p58 = por %p56, %p57
      %p59 = scmp.ne.s32.totalorder %s45, %s46
      %p60 = scmp.eq.s32.totalorder %s24, 1
      %p61 = por %p59, %p60
      %p63 = scmp.ne.s32.totalorder %s46, %s62
      %p64 = scmp.eq.s32.totalorder %s24, 0
      %p65 = por %p63, %p64
      %s66 = ssub.s32 %s26, %s33
      %s67 = ssub.s32 %s25, %s37
      %s68 = sor.u32 %s66, %s67
      %p69 = scmp.eq.s32.totalorder %s68, 0
      %s71 = sadd.s32 %s70, 1
      %s72 = scalar_select %p69, %s70, %s71
      %p75 = pneg %p69
      %p76 = scmp.eq.s32.totalorder %s18, 1
      %p77 = por %p75, %p76
      %p78 = scmp.ne.s32.totalorder %s70, %s73
      %p79 = scmp.eq.s32.totalorder %s18, 0
      %p80 = por %p78, %p79
      %p81 = scmp.ne.s32.totalorder %s70, %s73
      %p82 = scmp.eq.s32.totalorder %s23, 1
      %p83 = por %p81, %p82
      %p84 = scmp.ne.s32.totalorder %s73, %s74
      %p85 = scmp.eq.s32.totalorder %s23, 0
      %p86 = por %p84, %p85
      %p87 = scmp.ne.s32.totalorder %s73, %s74
      %p88 = scmp.eq.s32.totalorder %s24, 1
      %p89 = por %p87, %p88
      %p91 = scmp.ne.s32.totalorder %s74, %s90
      %p92 = scmp.eq.s32.totalorder %s24, 0
      %p93 = por %p91, %p92
      %s94 = ssub.s32 %s26, %s33
      %s95 = ssub.s32 %s25, %s37
      %s96 = sor.u32 %s94, %s95
      %p97 = scmp.eq.s32.totalorder %s96, 0
      %s99 = sadd.s32 %s98, 1
      %s100 = scalar_select %p97, %s98, %s99
      %p103 = pneg %p97
      %p104 = scmp.eq.s32.totalorder %s18, 1
      %p105 = por %p103, %p104
      %p106 = scmp.ne.s32.totalorder %s98, %s101
      %p107 = scmp.eq.s32.totalorder %s18, 0
      %p108 = por %p106, %p107
      %p109 = scmp.ne.s32.totalorder %s98, %s101
      %p110 = scmp.eq.s32.totalorder %s23, 1
      %p111 = por %p109, %p110
      %p112 = scmp.ne.s32.totalorder %s101, %s102
      %p113 = scmp.eq.s32.totalorder %s23, 0
      %p114 = por %p112, %p113
      %p115 = scmp.ne.s32.totalorder %s101, %s102
      %p116 = scmp.eq.s32.totalorder %s24, 1
      %p117 = por %p115, %p116
      %p119 = scmp.ne.s32.totalorder %s102, %s118
      %p120 = scmp.eq.s32.totalorder %s24, 0
      %p121 = por %p119, %p120
      %s122 = ssub.s32 %s26, %s33
      %s123 = ssub.s32 %s25, %s37
      %s124 = sor.u32 %s122, %s123
      %p125 = scmp.eq.s32.totalorder %s124, 0
      %s127 = sadd.s32 %s126, 1
      %s128 = scalar_select %p125, %s126, %s127
      %p131 = pneg %p125
      %p132 = scmp.eq.s32.totalorder %s18, 1
      %p133 = por %p131, %p132
      %p134 = scmp.ne.s32.totalorder %s126, %s129
      %p135 = scmp.eq.s32.totalorder %s18, 0
      %p136 = por %p134, %p135
      %p137 = scmp.ne.s32.totalorder %s126, %s129
      %p138 = scmp.eq.s32.totalorder %s23, 1
      %p139 = por %p137, %p138
      %p140 = scmp.ne.s32.totalorder %s129, %s130
      %p141 = scmp.eq.s32.totalorder %s23, 0
      %p142 = por %p140, %p141
      %p143 = scmp.ne.s32.totalorder %s129, %s130
      %p144 = scmp.eq.s32.totalorder %s24, 1
      %p145 = por %p143, %p144
      %p147 = scmp.ne.s32.totalorder %s130, %s146
      %p148 = scmp.eq.s32.totalorder %s24, 0
      %p149 = por %p147, %p148
      %p150 = scmp.le.s32.totalorder 1, %s18
      %p151 = scmp.lt.s32.totalorder %s18, 3
      %p152 = pnand %p150, %p151
      %p153 = pneg %p152
      // Predicated region
      $region9: #{tpu_custom_call.1} parent=5 // pred_check
        _
      $region10: #{tpu_custom_call.1} parent=5 // pred_check_branch
        %155 = sbr.rel (%p152) target = $region12
      $region11: #{tpu_custom_call.1} parent=5 // pred_region
        %s156 = ssub.s32 %s18, 1
      $region12: #{tpu_custom_call.1} parent=5 // pred_fallthru
        _
      %p157 = scmp.lt.s32.totalorder %s18, 2
      // Predicated region
      $region13: #{tpu_custom_call.1} parent=5 // pred_check
        %p158 = pneg %p157
      $region14: #{tpu_custom_call.1} parent=5 // pred_check_branch
        %160 = sbr.rel (%p158) target = $region16
      $region15: #{tpu_custom_call.1} parent=5 // pred_region
        // Predicated region
        $region17: #{tpu_custom_call.1} parent=15 // pred_check
          %p161 = pneg %p52
        $region18: #{tpu_custom_call.1} parent=15 // pred_check_branch
          %163 = sbr.rel (%p161) target = $region20
        $region19: #{tpu_custom_call.1} parent=15 // pred_region
          %s164 = sand.u32 %s42, 1
          %s165 = scalar_lea.sflag [#allocation3], %s164
          %s166 = sand.u32 %s42, 1
          %s167 = smul.addr %s166, 8
          %s168 = scalar_lea.vmem [#allocation2], %s167
          %s169 = smul.u32 2, %s25
          %171 = vsyncadd %s165, 0
          %s172 = smul.addr %s26, 2
          %s173 = sadd.s32 %s169, %s172
          %s174 = smul.addr %s173, 4
          %s175 = scalar_lea.hbm %s0, %s174
          %s177 = sshll.u32 %s175, 4
          %s178 = int_to_ptr.hbm [resolvable:$true] %s177
          %s179 = sshll.u32 %s168, 4
          %s180 = int_to_ptr.vmem [resolvable:$true] %s179
          %182 = dma.hbm_to_vmem [thread:$0]  %s178, 128, %s180, %s165
        $region20: #{tpu_custom_call.1} parent=15 // pred_fallthru
          _
        // Predicated region
        $region21: #{tpu_custom_call.1} parent=15 // pred_check
          %p183 = pneg %p80
        $region22: #{tpu_custom_call.1} parent=15 // pred_check_branch
          %185 = sbr.rel (%p183) target = $region24
        $region23: #{tpu_custom_call.1} parent=15 // pred_region
          %s186 = sand.u32 %s18, 1
          %s187 = scalar_lea.sflag [#allocation6], %s186
          %s188 = sand.u32 %s70, 1
          %s189 = smul.addr %s188, 2
          %s190 = scalar_lea.vmem [#allocation5], %s189
          %s191 = smul.u32 2, %s25
          %193 = vsyncadd %s187, 0
          %s194 = smul.addr %s26, 2
          %s195 = sadd.s32 %s191, %s194
          %s196 = scalar_lea.hbm %s1, %s195
          %s198 = sshll.u32 %s196, 4
          %s199 = int_to_ptr.hbm [resolvable:$true] %s198
          %s200 = sshll.u32 %s190, 4
          %s201 = int_to_ptr.vmem [resolvable:$true] %s200
          %203 = dma.hbm_to_vmem [thread:$0]  %s199, 32, %s201, %s187
        $region24: #{tpu_custom_call.1} parent=15 // pred_fallthru
          _
        // Predicated region
        $region25: #{tpu_custom_call.1} parent=15 // pred_check
          %p204 = pneg %p108
        $region26: #{tpu_custom_call.1} parent=15 // pred_check_branch
          %206 = sbr.rel (%p204) target = $region28
        $region27: #{tpu_custom_call.1} parent=15 // pred_region
          %s207 = sand.u32 %s18, 1
          %s208 = scalar_lea.sflag [#allocation6], %s207
          %s209 = sand.u32 %s98, 1
          %s210 = smul.addr %s209, 2
          %s211 = scalar_lea.vmem [#allocation7], %s210
          %s212 = smul.u32 2, %s25
          %214 = vsyncadd %s208, 0
          %s215 = smul.addr %s26, 2
          %s216 = sadd.s32 %s212, %s215
          %s217 = scalar_lea.hbm %s2, %s216
          %s219 = sshll.u32 %s217, 4
          %s220 = int_to_ptr.hbm [resolvable:$true] %s219
          %s221 = sshll.u32 %s211, 4
          %s222 = int_to_ptr.vmem [resolvable:$true] %s221
          %224 = dma.hbm_to_vmem [thread:$0]  %s220, 32, %s222, %s208
        $region28: #{tpu_custom_call.1} parent=15 // pred_fallthru
          _
      $region16: #{tpu_custom_call.1} parent=5 // pred_fallthru
        _
      %p225 = scmp.le.s32.totalorder 1, %s18
      %p226 = scmp.lt.s32.totalorder %s18, 3
      %p227 = pnand %p225, %p226
      %p228 = pneg %p227
      // Predicated region
      $region29: #{tpu_custom_call.1} parent=5 // pred_check
        _
      $region30: #{tpu_custom_call.1} parent=5 // pred_check_branch
        %230 = sbr.rel (%p227) target = $region32
      $region31: #{tpu_custom_call.1} parent=5 // pred_region
        %s231 = ssub.s32 %s18, 1
        %s232 = sand.u32 %s45, 1
        %s233 = scalar_lea.sflag [#allocation3], %s232
        %s234 = sand.u32 %s45, 1
        %s235 = smul.addr %s234, 8
        %s236 = scalar_lea.vmem [#allocation2], %s235
        // Predicated region
        $region33: #{tpu_custom_call.1} parent=31 // pred_check
          %p237 = pneg %p58
        $region34: #{tpu_custom_call.1} parent=31 // pred_check_branch
          %239 = sbr.rel (%p237) target = $region36
        $region35: #{tpu_custom_call.1} parent=31 // pred_region
          %241 = dma.done %s233, 128
        $region36: #{tpu_custom_call.1} parent=31 // pred_fallthru
          _
        %s242 = sand.u32 %s23, 1
        %s243 = scalar_lea.sflag [#allocation6], %s242
        %s244 = sand.u32 %s73, 1
        %s245 = smul.addr %s244, 2
        %s246 = scalar_lea.vmem [#allocation5], %s245
        // Predicated region
        $region37: #{tpu_custom_call.1} parent=31 // pred_check
          %p247 = pneg %p86
        $region38: #{tpu_custom_call.1} parent=31 // pred_check_branch
          %249 = sbr.rel (%p247) target = $region40
        $region39: #{tpu_custom_call.1} parent=31 // pred_region
          %251 = dma.done %s243, 32
        $region40: #{tpu_custom_call.1} parent=31 // pred_fallthru
          _
        %s252 = sand.u32 %s23, 1
        %s253 = scalar_lea.sflag [#allocation6], %s252
        %s254 = sand.u32 %s101, 1
        %s255 = smul.addr %s254, 2
        %s256 = scalar_lea.vmem [#allocation7], %s255
        // Predicated region
        $region41: #{tpu_custom_call.1} parent=31 // pred_check
          %p257 = pneg %p114
        $region42: #{tpu_custom_call.1} parent=31 // pred_check_branch
          %259 = sbr.rel (%p257) target = $region44
        $region43: #{tpu_custom_call.1} parent=31 // pred_region
          %261 = dma.done %s253, 32
        $region44: #{tpu_custom_call.1} parent=31 // pred_fallthru
          _
        %s262 = sand.u32 %s45, 1
        %s263 = scalar_lea.sflag [#allocation3], %s262
        %s264 = sand.u32 %s45, 1
        %s265 = smul.addr %s264, 8
        %s266 = scalar_lea.vmem [#allocation2], %s265
        %p267 = pneg %p58
        %p268 = pneg %p55
        %s269 = sand.u32 %s23, 1
        %s270 = scalar_lea.sflag [#allocation6], %s269
        %s271 = sand.u32 %s73, 1
        %s272 = smul.addr %s271, 2
        %s273 = scalar_lea.vmem [#allocation5], %s272
        %p274 = pneg %p86
        %p275 = pneg %p83
        %s276 = sand.u32 %s23, 1
        %s277 = scalar_lea.sflag [#allocation6], %s276
        %s278 = sand.u32 %s101, 1
        %s279 = smul.addr %s278, 2
        %s280 = scalar_lea.vmem [#allocation7], %s279
        %p281 = pneg %p114
        %p282 = pneg %p111
        %p283 = pneg %p142
        %p284 = pneg %p139
        %s285 = sand.u32 %s129, 1
        %s286 = scalar_lea.sflag [#allocation4], %s285
        %s287 = sand.u32 %s129, 1
        %s288 = smul.addr %s287, 2
        %s289 = scalar_lea.vmem [#allocation8], %s288
        %s290 = smul.u32 2, %s27
        %s291 = smul.u32 2, %s27
        %s292 = smul.u32 2, %s27
        %s293 = smul.u32 2, %s27
        %v294 = vld [vmem:[%s236] sm:$0xff]
        %v295 = vld [vmem:[%s246] sm:$0x3]
        %297 = vst [vmem:[#allocation1] ss:$2 sm:$0xff] %v294
        %v298 = vld.sshfl [vmem:[#allocation1] sm:$0xff pattern:$0x75316420]
        %v299 = vld.sshfl [vmem:[#allocation1 + $0x8] sm:$0xff pattern:$0x75316420]
        %vm302 = vcmask 1043456
        %v303 = vsel %vm302, %v298, -inf
        %v304 = vrot.slane %v303, 4
        %v305 = vmax.f32 %v303, %v304
        %v306 = vrot.slane %v305, 2
        %v307 = vmax.f32 %v305, %v306
        %v308 = vrot.slane %v307, 1
        %v309 = vmax.f32 %v307, %v308
        %v310 = vsel %vm302, %v299, -inf
        %v311 = vrot.slane %v310, 4
        %v312 = vmax.f32 %v310, %v311
        %v313 = vrot.slane %v312, 2
        %v314 = vmax.f32 %v312, %v313
        %v315 = vrot.slane %v314, 1
        %v316 = vmax.f32 %v314, %v315
        %v319 = vrot.slane %v316, 4
        %v320 = vsel %vm302, %v309, %v319
        %v322 = vsub.f32 %v294, %v320
        %v323 = vmul.f32 %v322, 1.442695
        %v324 = vpow.pop %v323
        %326 = vst [vmem:[#allocation1] ss:$2 sm:$0xff] %v324
        %v327 = vld.sshfl [vmem:[#allocation1] sm:$0xff pattern:$0x75316420]
        %v328 = vld.sshfl [vmem:[#allocation1 + $0x8] sm:$0xff pattern:$0x75316420]
        %v331 = vsel %vm302, %v327, 0.0
        %v332 = vrot.slane %v331, 4
        %v333 = vadd.f32 %v331, %v332
        %v334 = vrot.slane %v333, 2
        %v335 = vadd.f32 %v333, %v334
        %v336 = vrot.slane %v335, 1
        %v337 = vadd.f32 %v335, %v336
        %v338 = vsel %vm302, %v328, 0.0
        %v339 = vrot.slane %v338, 4
        %v340 = vadd.f32 %v338, %v339
        %v341 = vrot.slane %v340, 2
        %v342 = vadd.f32 %v340, %v341
        %v343 = vrot.slane %v342, 1
        %v344 = vadd.f32 %v342, %v343
        %v345 = vlaneseq
        %v346 = vshrl.u32 %v345, 7
        %v347 = vperm.slane %v295, 0
        %v348 = vperm.slane %v295, 1
        %vm349 = vcmp.eq.s32.totalorder %v346, %v347
        %vm350 = vcmp.eq.s32.totalorder %v346, %v348
        %352 = vst [vmem:[#allocation1] ss:$2 sm:$0xff] %v322
        %v353 = vld.sshfl [vmem:[#allocation1] sm:$0xff pattern:$0x75316420]
        %v354 = vld.sshfl [vmem:[#allocation1 + $0x8] sm:$0xff pattern:$0x75316420]
        %v357 = vsel %vm349, %v353, 0.0
        %v358 = vsel %vm350, %v354, 0.0
        %v359 = vsel %vm302, %v357, 0.0
        %v360 = vrot.slane %v359, 4
        %v361 = vadd.f32 %v359, %v360
        %v362 = vrot.slane %v361, 2
        %v363 = vadd.f32 %v361, %v362
        %v364 = vrot.slane %v363, 1
        %v365 = vadd.f32 %v363, %v364
        %v366 = vsel %vm302, %v358, 0.0
        %v367 = vrot.slane %v366, 4
        %v368 = vadd.f32 %v366, %v367
        %v369 = vrot.slane %v368, 2
        %v370 = vadd.f32 %v368, %v369
        %v371 = vrot.slane %v370, 1
        %v372 = vadd.f32 %v370, %v371
        %v373 = vlog2.pop %v337
        %v374 = vmul.f32 %v373, 0.6931472
        %v375 = vlog2.pop %v344
        %v376 = vmul.f32 %v375, 0.6931472
        %v377 = vsub.f32 %v365, %v374
        %v378 = vsub.f32 %v372, %v376
        %v379 = vmul.f32 %v377, 1.442695
        %v380 = vpow.pop %v379
        %v381 = vmul.f32 %v378, 1.442695
        %v382 = vpow.pop %v381
        %v383 = vld [vmem:[%s256] sm:$0x3]
        %v385 = vperm.slane %v383, 0
        %v386 = vperm.slane %v383, 1
        %v389 = vmul.f32 %v377, %v385
        %v390 = vmul.f32 %v378, %v386
        %v391 = vsub.f32 1.0, %v380
        %v392 = vsub.f32 1.0, %v382
        %v393 = vmax.f32 %v391, 0.0
        %v394 = vmax.f32 %v392, 0.0
        %v395 = vmul.f32 %v393, %v393
        %v396 = vmul.f32 %v394, %v394
        %v397 = vmul.f32 %v395, %v389
        %v398 = vmul.f32 %v396, %v390
        %v399 = vsub.f32 0.0, %v397
        %v400 = vsub.f32 0.0, %v398
        %v403 = vrot.slane %v400, 7
        %vm404 = vcmask 1040384
        %v405 = vsel %vm404, %v399, %v403
        %v407 = vlaneseq
        %vm408 = vcmp.ge.s32.totalorder %v407, 0
        %vm409 = vcmp.lt.s32.totalorder %v407, 256
        %vm410 = vmand %vm408, %vm409
        %411 = vst.msk [vmem:[%s289] sm:$0x3] %vm410, %v405
        %s412 = sand.u32 %s129, 1
        %s413 = scalar_lea.sflag [#allocation4], %s412
        %s414 = sand.u32 %s129, 1
        %s415 = smul.addr %s414, 2
        %s416 = scalar_lea.vmem [#allocation8], %s415
        // Predicated region
        $region45: #{tpu_custom_call.1} parent=31 // pred_check
          %p417 = pneg %p139
        $region46: #{tpu_custom_call.1} parent=31 // pred_check_branch
          %419 = sbr.rel (%p417) target = $region48
        $region47: #{tpu_custom_call.1} parent=31 // pred_region
          %s420 = smul.u32 2, %s27
          %422 = vsyncadd %s413, 0
          %s423 = smul.addr %s28, 2
          %s424 = sadd.s32 %s420, %s423
          %s425 = scalar_lea.hbm %s3, %s424
          %s427 = sshll.u32 %s416, 4
          %s428 = int_to_ptr.vmem [resolvable:$true] %s427
          %s429 = sshll.u32 %s425, 4
          %s430 = int_to_ptr.hbm [resolvable:$true] %s429
          %432 = dma.vmem_to_hbm [thread:$0]  %s428, 32, %s430, %s413
        $region48: #{tpu_custom_call.1} parent=31 // pred_fallthru
          _
      $region32: #{tpu_custom_call.1} parent=5 // pred_fallthru
        _
      %p433 = scmp.le.s32.totalorder 2, %s18
      // Predicated region
      $region49: #{tpu_custom_call.1} parent=5 // pred_check
        %p434 = pneg %p433
      $region50: #{tpu_custom_call.1} parent=5 // pred_check_branch
        %436 = sbr.rel (%p434) target = $region52
      $region51: #{tpu_custom_call.1} parent=5 // pred_region
        %s437 = ssub.s32 %s18, 2
        // Predicated region
        $region53: #{tpu_custom_call.1} parent=51 // pred_check
          %p438 = pneg %p145
        $region54: #{tpu_custom_call.1} parent=51 // pred_check_branch
          %440 = sbr.rel (%p438) target = $region56
        $region55: #{tpu_custom_call.1} parent=51 // pred_region
          %s441 = sand.u32 %s130, 1
          %s442 = scalar_lea.sflag [#allocation4], %s441
          %s443 = sand.u32 %s130, 1
          %s444 = smul.addr %s443, 2
          %s445 = scalar_lea.vmem [#allocation8], %s444
          %447 = dma.done %s442, 32
        $region56: #{tpu_custom_call.1} parent=51 // pred_fallthru
          _
      $region52: #{tpu_custom_call.1} parent=5 // pred_fallthru
        _
    $region6: #{tpu_custom_call.1} parent=1 // loop_footer
      %s22 = sadd.s32 1, %s18
    $region7: #{tpu_custom_call.1} parent=1 // loop_footer_branch
      %17 = sbr.rel target = $region3
    $region8: #{tpu_custom_call.1} parent=1 // loop_exit
      _
    %448 = vsyncpa [#allocation3], 1
    %s449 = scalar_lea.sflag [#allocation3], 1
    %450 = vsyncpa %s449, 1
    %451 = vsyncpa [#allocation6], 1
    %s452 = scalar_lea.sflag [#allocation6], 1
    %453 = vsyncpa %s452, 1
    %454 = vsyncpa [#allocation4], 1
    %s455 = scalar_lea.sflag [#allocation4], 1
    %456 = vsyncpa %s455, 1

</llo_original>
